<compile_context>
chip_gen: v5e
topology: v5e:2x2
jax: 0.10.0
libtpu: 0.0.40
codegen_flags: <defaults>
</compile_context>

<pallas_src>
import jax
import jax.numpy as jnp
from jax.experimental import pallas as pl
from jax.experimental.pallas import tpu as pltpu

LANE = 128          # f32 lane width
MAX_TM = 512        # row-tile: 512*128*4 B = 256 KiB per input tile


def _make_loss_kernel(base_loss, inv_n):
    """Build the tile kernel for a given (static) loss kind and 1/N constant."""
    inv_n = float(inv_n)

    def kernel(p_ref, t_ref, out_ref, acc_ref):
        i = pl.program_id(0)

        @pl.when(i == 0)
        def _init():
            acc_ref[...] = jnp.zeros_like(acc_ref)

        p = p_ref[...]
        t = t_ref[...]

        if base_loss == "mse":
            d = p - t
            e = d * d
        elif base_loss == "mae":
            e = jnp.abs(p - t)
        elif base_loss == "huber":            # delta = 1.0 (PyTorch default)
            d = jnp.abs(p - t)
            e = jnp.where(d < 1.0, 0.5 * d * d, d - 0.5)
        elif base_loss == "bce":              # clamp log at -100 like PyTorch
            logp = jnp.maximum(jnp.log(p), -100.0)
            logq = jnp.maximum(jnp.log(1.0 - p), -100.0)
            e = -(t * logp + (1.0 - t) * logq)
        else:
            raise ValueError(f"unsupported base_loss: {base_loss}")

        # one-pass partial reduction of this tile into the resident accumulator
        acc_ref[...] += jnp.sum(e, axis=0, keepdims=True)       # (1, 128)

        @pl.when(i == pl.num_programs(0) - 1)
        def _finalize():
            out_ref[...] = jnp.sum(acc_ref[...], axis=1, keepdims=True) * inv_n

    return kernel


def custom_loss(predictions, targets, base_loss="mse"):
    """Mean-reduced loss(predictions, targets) as a scalar f32, via Pallas."""
    assert predictions.shape == targets.shape, "shape mismatch"
    n = int(predictions.size)

    p = predictions.reshape(-1).astype(jnp.float32)
    t = targets.reshape(-1).astype(jnp.float32)

    # flatten to lane-dense (rows, 128) and pad rows so the grid divides evenly;
    # zero padding (in both operands) contributes 0 to all supported losses.
    rows = -(-n // LANE)
    rows8 = -(-rows // 8) * 8                 # f32 sublane alignment
    tm = min(MAX_TM, rows8)
    padded_rows = -(-rows8 // tm) * tm
    pad = padded_rows * LANE - n
    if pad:
        p = jnp.pad(p, (0, pad))
        t = jnp.pad(t, (0, pad))
    p2 = p.reshape(padded_rows, LANE)
    t2 = t.reshape(padded_rows, LANE)

    grid = (padded_rows // tm,)
    kernel = _make_loss_kernel(base_loss, 1.0 / n)

    out = pl.pallas_call(
        kernel,
        out_shape=jax.ShapeDtypeStruct((1, 1), jnp.float32),
        grid_spec=pltpu.PrefetchScalarGridSpec(
            num_scalar_prefetch=0,
            grid=grid,
            in_specs=[
                pl.BlockSpec((tm, LANE), lambda i: (i, 0)),
                pl.BlockSpec((tm, LANE), lambda i: (i, 0)),
            ],
            out_specs=pl.BlockSpec((1, 1), lambda i: (0, 0)),
            scratch_shapes=[pltpu.VMEM((1, LANE), jnp.float32)],
        ),
        compiler_params=pltpu.CompilerParams(
            dimension_semantics=("arbitrary",),   # reduction axis (resident acc)
            vmem_limit_bytes=32 * 1024 * 1024,
        ),
    )(p2, t2)
    return out[0, 0]


def reference(p, t, base_loss="mse"):
    p = p.astype(jnp.float32)
    t = t.astype(jnp.float32)
    if base_loss == "mse":
        return jnp.mean((p - t) ** 2)
    if base_loss == "mae":
        return jnp.mean(jnp.abs(p - t))
    if base_loss == "huber":
        d = jnp.abs(p - t)
        return jnp.mean(jnp.where(d < 1.0, 0.5 * d * d, d - 0.5))
    if base_loss == "bce":
        logp = jnp.maximum(jnp.log(p), -100.0)
        logq = jnp.maximum(jnp.log(1.0 - p), -100.0)
        return jnp.mean(-(t * logp + (1.0 - t) * logq))
    raise ValueError(base_loss)


if __name__ == "__main__":
    key = jax.random.PRNGKey(0)
    kp, kt, kb = jax.random.split(key, 3)

    B, D = 8, 32
    preds = jax.random.normal(kp, (B, D), jnp.float32)
    tgts = jax.random.normal(kt, (B, D), jnp.float32)

    # default base_loss='mse', plus the other supported modes
    for kind in ("mse", "mae", "huber"):
        out = jax.block_until_ready(custom_loss(preds, tgts, kind))
        ref = reference(preds, tgts, kind)
        assert jnp.allclose(out, ref, atol=1e-5, rtol=1e-5), (kind, float(jnp.abs(out - ref)))

    # BCE needs predictions in (0,1) and targets in [0,1]
    p_bce = jax.nn.sigmoid(preds)
    t_bce = jax.random.uniform(kb, (B, D), jnp.float32)
    out = jax.block_until_ready(custom_loss(p_bce, t_bce, "bce"))
    ref = reference(p_bce, t_bce, "bce")
    assert jnp.allclose(out, ref, atol=1e-5, rtol=1e-5), float(jnp.abs(out - ref))

    # larger, non-aligned shape -> exercises padding + multi-step grid reduction
    kp2, kt2 = jax.random.split(kb)
    big_p = jax.random.normal(kp2, (300, 257), jnp.float32)
    big_t = jax.random.normal(kt2, (300, 257), jnp.float32)
    out = jax.block_until_ready(custom_loss(big_p, big_t))          # 'mse' default
    ref = reference(big_p, big_t)
    assert jnp.allclose(out, ref, atol=1e-4, rtol=1e-4), float(jnp.abs(out - ref))

    print("KERNEL_OK")
</pallas_src>

<mosaic_0001>
module attributes {stable_mosaic.version = 11 : i64} {
  func.func @kernel(%arg0: i32, %arg1: memref<8x128xf32, #tpu.memory_space<vmem>>, %arg2: memref<8x128xf32, #tpu.memory_space<vmem>>, %arg3: memref<1x1xf32, #tpu.memory_space<vmem>>, %arg4: memref<1x128xf32, #tpu.memory_space<vmem>>) attributes {dimension_semantics = [#tpu.dimension_semantics<arbitrary>], iteration_bounds = array<i64: 1>, scalar_prefetch = 0 : i64, scratch_operands = 1 : i64, tpu.core_type = #tpu.core_type<tc>, window_params = [{transform_indices = @transform_0, window_bounds = array<i64: 8, 128>}, {transform_indices = @transform_1, window_bounds = array<i64: 8, 128>}, {pipeline_mode = #tpu.pipeline_mode<synchronous>, transform_indices = @transform_2, window_bounds = array<i64: 1, 1>}]} {
    %c0_i32 = arith.constant 0 : i32
    %0 = arith.cmpi eq, %arg0, %c0_i32 : i32
    %1 = arith.extui %0 : i1 to i32
    %c0_i32_0 = arith.constant 0 : i32
    %2 = arith.cmpi ne, %1, %c0_i32_0 : i32
    scf.if %2 {
      %cst_10 = arith.constant 0.000000e+00 : f32
      %15 = vector.broadcast %cst_10 : f32 to vector<1x128xf32>
      %c0_11 = arith.constant 0 : index
      %c0_12 = arith.constant 0 : index
      %16 = vector.load %arg4[%c0_11, %c0_12] : memref<1x128xf32, #tpu.memory_space<vmem>>, vector<1x128xf32>
      tpu.vector_store %arg4[%c0_11, %c0_12], %15 {strides = array<i32>} : memref<1x128xf32, #tpu.memory_space<vmem>>, vector<1x128xf32>,
    } else {
    }
    %c0 = arith.constant 0 : index
    %c0_1 = arith.constant 0 : index
    %3 = vector.load %arg1[%c0, %c0_1] : memref<8x128xf32, #tpu.memory_space<vmem>>, vector<8x128xf32>
    %c0_2 = arith.constant 0 : index
    %c0_3 = arith.constant 0 : index
    %4 = vector.load %arg2[%c0_2, %c0_3] : memref<8x128xf32, #tpu.memory_space<vmem>>, vector<8x128xf32>
    %5 = arith.subf %3, %4 : vector<8x128xf32>
    %6 = arith.mulf %5, %5 : vector<8x128xf32>
    %c0_4 = arith.constant 0 : index
    %c0_5 = arith.constant 0 : index
    %7 = vector.load %arg4[%c0_4, %c0_5] : memref<1x128xf32, #tpu.memory_space<vmem>>, vector<1x128xf32>
    %cst = arith.constant dense<0.000000e+00> : vector<128xf32>
    %8 = vector.multi_reduction <add>, %6, %cst [0] : vector<8x128xf32> to vector<128xf32>
    %9 = vector.shape_cast %8 : vector<128xf32> to vector<1x128xf32>
    %10 = arith.addf %7, %9 : vector<1x128xf32>
    %c0_6 = arith.constant 0 : index
    %c0_7 = arith.constant 0 : index
    %11 = vector.load %arg4[%c0_6, %c0_7] : memref<1x128xf32, #tpu.memory_space<vmem>>, vector<1x128xf32>
    tpu.vector_store %arg4[%c0_6, %c0_7], %10 {strides = array<i32>} : memref<1x128xf32, #tpu.memory_space<vmem>>, vector<1x128xf32>,
    %c0_i32_8 = arith.constant 0 : i32
    %12 = arith.cmpi eq, %arg0, %c0_i32_8 : i32
    %13 = arith.extui %12 : i1 to i32
    %c0_i32_9 = arith.constant 0 : i32
    %14 = arith.cmpi ne, %13, %c0_i32_9 : i32
    scf.if %14 {
      %c0_10 = arith.constant 0 : index
      %c0_11 = arith.constant 0 : index
      %15 = vector.load %arg4[%c0_10, %c0_11] : memref<1x128xf32, #tpu.memory_space<vmem>>, vector<1x128xf32>
      %cst_12 = arith.constant dense<0.000000e+00> : vector<1xf32>
      %16 = vector.multi_reduction <add>, %15, %cst_12 [1] : vector<1x128xf32> to vector<1xf32>
      %17 = vector.shape_cast %16 : vector<1xf32> to vector<1x1xf32>
      %cst_13 = arith.constant 3.906250e-03 : f32
      %18 = vector.broadcast %cst_13 : f32 to vector<1x1xf32>
      %19 = arith.mulf %17, %18 : vector<1x1xf32>
      %c0_14 = arith.constant 0 : index
      %c0_15 = arith.constant 0 : index
      %20 = vector.load %arg3[%c0_14, %c0_15] : memref<1x1xf32, #tpu.memory_space<vmem>>, vector<1x1xf32>
      tpu.vector_store %arg3[%c0_14, %c0_15], %19 {strides = array<i32>} : memref<1x1xf32, #tpu.memory_space<vmem>>, vector<1x1xf32>,
    } else {
    }
    return
  }
  func.func @transform_0(%arg0: i32) -> (i32, i32) {
    %c0_i32 = arith.constant 0 : i32
    %c0_i32_0 = arith.constant 0 : i32
    return %arg0, %c0_i32 : i32, i32
  }
  func.func @transform_1(%arg0: i32) -> (i32, i32) {
    %c0_i32 = arith.constant 0 : i32
    %c0_i32_0 = arith.constant 0 : i32
    return %arg0, %c0_i32 : i32, i32
  }
  func.func @transform_2(%arg0: i32) -> (i32, i32) {
    %c0_i32 = arith.constant 0 : i32
    %c0_i32_0 = arith.constant 0 : i32
    %c0_i32_1 = arith.constant 0 : i32
    return %c0_i32, %c0_i32_0 : i32, i32
  }
}

</mosaic_0001>

<llo_original>
// kernel: tpu_custom_call.1
$region0: #{tpu_custom_call.1}
  #allocation0 [shape = 'u32[]', space=smem, size = 0x4, offset = 0x4, fixed_abs, tag = 'smem constant byte address 0x4 - core index']
  #allocation1 [shape = 'u32[72,128]{1,0:T(1,128)}', space=vmem, size = 0x9000, scoped, tag = 'internal scratch']
  #allocation2 [shape = 'f32[1,128]{1,0:T(1,128)}', space=vmem, size = 0x200, scoped, tag = 'scratch operand']
  %s0 = inlined_call_operand.hbm [shape: f32[8,128], index: 0, kind: input, shape index: {}]
  %s1 = inlined_call_operand.hbm [shape: f32[8,128], index: 1, kind: input, shape index: {}]
  %s2 = inlined_call_operand.hbm [shape: f32[1,1], index: 2, kind: output, shape index: {}]
  %s3 = sld [smem:[#allocation0]]
  $region34: #{tpu_custom_call.1} parent=0
    _
  %s5 = ssub.s32 1, %s3
  %s6 = scalar_select 0, %s5, %s3
  $region1: #{tpu_custom_call.1} parent=0
    #allocation3 [shape = 'u8[4096]{0}', space=vmem, size = 0x1000, scoped, tag = 'input window, operand 0, single buffered']
    #allocation4 [shape = 's32[1]{0}', space=sflag, size = 0x4, scoped, tag = 'scoped memory for tpu_custom_call.1']
    #allocation5 [shape = 's32[1]{0}', space=sflag, size = 0x4, scoped, tag = 'scoped memory for tpu_custom_call.1']
    #allocation6 [shape = 'u8[4096]{0}', space=vmem, size = 0x1000, scoped, tag = 'input window, operand 1, single buffered']
    #allocation7 [shape = 's32[1]{0}', space=sflag, size = 0x4, scoped, tag = 'scoped memory for tpu_custom_call.1']
    #allocation8 [shape = 'u8[512]{0}', space=vmem, size = 0x400, scoped, tag = 'output window, operand 0, single buffered']
    %7 = vsyncpa [#allocation4], 0
    %8 = vsyncpa [#allocation7], 0
    %9 = vsyncpa [#allocation5], 0
    // Predicated region
    $region2: #{tpu_custom_call.1} parent=1 // pred_check
      _
    $region3: #{tpu_custom_call.1} parent=1 // pred_check_branch
      %11 = sbr.rel (0) target = $region5
    $region4: #{tpu_custom_call.1} parent=1 // pred_region
      %13 = vsyncadd [#allocation4], 0
      %s15 = sshll.u32 %s0, 4
      %s16 = int_to_ptr.hbm [resolvable:$true] %s15
      %s17 = sshll.u32 [#allocation3], 4
      %s18 = int_to_ptr.vmem [resolvable:$true] %s17
      %20 = dma.hbm_to_vmem [thread:$0]  %s16, 128, %s18, [#allocation4]
    $region5: #{tpu_custom_call.1} parent=1 // pred_fallthru
      _
    // Predicated region
    $region6: #{tpu_custom_call.1} parent=1 // pred_check
      _
    $region7: #{tpu_custom_call.1} parent=1 // pred_check_branch
      %22 = sbr.rel (0) target = $region9
    $region8: #{tpu_custom_call.1} parent=1 // pred_region
      %24 = vsyncadd [#allocation7], 0
      %s26 = sshll.u32 %s1, 4
      %s27 = int_to_ptr.hbm [resolvable:$true] %s26
      %s28 = sshll.u32 [#allocation6], 4
      %s29 = int_to_ptr.vmem [resolvable:$true] %s28
      %31 = dma.hbm_to_vmem [thread:$0]  %s27, 128, %s29, [#allocation7]
    $region9: #{tpu_custom_call.1} parent=1 // pred_fallthru
      _
    // Predicated region
    $region10: #{tpu_custom_call.1} parent=1 // pred_check
      _
    $region11: #{tpu_custom_call.1} parent=1 // pred_check_branch
      %33 = sbr.rel (0) target = $region13
    $region12: #{tpu_custom_call.1} parent=1 // pred_region
      %35 = dma.done [#allocation4], 128
    $region13: #{tpu_custom_call.1} parent=1 // pred_fallthru
      _
    // Predicated region
    $region14: #{tpu_custom_call.1} parent=1 // pred_check
      _
    $region15: #{tpu_custom_call.1} parent=1 // pred_check_branch
      %37 = sbr.rel (0) target = $region17
    $region16: #{tpu_custom_call.1} parent=1 // pred_region
      %39 = dma.done [#allocation7], 128
    $region17: #{tpu_custom_call.1} parent=1 // pred_fallthru
      _
    %p40 = scmp.eq.s32.totalorder 0, 0
    // Predicated region
    $region18: #{tpu_custom_call.1} parent=1 // pred_check
      %p41 = pneg %p40
    $region19: #{tpu_custom_call.1} parent=1 // pred_check_branch
      %43 = sbr.rel (%p41) target = $region21
    $region20: #{tpu_custom_call.1} parent=1 // pred_region
      %44 = vst [vmem:[#allocation2] sm:$0x1] 0.0
    $region21: #{tpu_custom_call.1} parent=1 // pred_fallthru
      _
    %v45 = vld [vmem:[#allocation3] sm:$0xff]
    %v46 = vld [vmem:[#allocation6] sm:$0xff]
    %v47 = vsub.f32 %v45, %v46
    %v48 = vmul.f32 %v47, %v47
    %v49 = vld [vmem:[#allocation2] sm:$0x1]
    %v50 = vrot.slane %v48, 4
    %v51 = vadd.f32 %v48, %v50
    %v52 = vrot.slane %v51, 2
    %v53 = vadd.f32 %v51, %v52
    %v54 = vrot.slane %v53, 1
    %v55 = vadd.f32 %v53, %v54
    %v56 = vadd.f32 %v49, %v55
    %57 = vst [vmem:[#allocation2] sm:$0x1] %v56
    // Predicated region
    $region22: #{tpu_custom_call.1} parent=1 // pred_check
      %p58 = pneg %p40
    $region23: #{tpu_custom_call.1} parent=1 // pred_check_branch
      %60 = sbr.rel (%p58) target = $region25
    $region24: #{tpu_custom_call.1} parent=1 // pred_region
      %v61 = vld [vmem:[#allocation2] sm:$0x1]
      %vm62 = vcmask 1040384
      %v63 = vsel %vm62, %v61, 0.0
      %64 = vadd.xlane.f32.xlu0 %v63
      %v65 = vpop.xlane.xlu0 %64
      %v66 = vmul.f32 %v65, 0.00390625
      %vm67 = vcmask 0
      %68 = vst.msk [vmem:[#allocation8] sm:$0x1] %vm67, %v66
    $region25: #{tpu_custom_call.1} parent=1 // pred_fallthru
      _
    // Predicated region
    $region26: #{tpu_custom_call.1} parent=1 // pred_check
      _
    $region27: #{tpu_custom_call.1} parent=1 // pred_check_branch
      %70 = sbr.rel (0) target = $region29
    $region28: #{tpu_custom_call.1} parent=1 // pred_region
      %72 = vsyncadd [#allocation5], 0
      %s74 = sshll.u32 [#allocation8], 4
      %s75 = int_to_ptr.vmem [resolvable:$true] %s74
      %s76 = sshll.u32 %s2, 4
      %s77 = int_to_ptr.hbm [resolvable:$true] %s76
      %79 = dma.vmem_to_hbm [thread:$0]  %s75, 16, %s77, [#allocation5]
    $region29: #{tpu_custom_call.1} parent=1 // pred_fallthru
      _
    // Predicated region
    $region30: #{tpu_custom_call.1} parent=1 // pred_check
      _
    $region31: #{tpu_custom_call.1} parent=1 // pred_check_branch
      %81 = sbr.rel (0) target = $region33
    $region32: #{tpu_custom_call.1} parent=1 // pred_region
      %83 = dma.done [#allocation5], 16
    $region33: #{tpu_custom_call.1} parent=1 // pred_fallthru
      _
    %84 = vsyncpa [#allocation4], 1
    %85 = vsyncpa [#allocation7], 1
    %86 = vsyncpa [#allocation5], 1

</llo_original>
